<compile_context>
chip_gen: v7x
topology: tpu7x:2x2x1
jax: 0.10.0
libtpu: 0.0.40
codegen_flags: <defaults>
</compile_context>

<pallas_src>
import jax
import jax.numpy as jnp
from jax.experimental import pallas as pl
from jax.experimental.pallas import tpu as pltpu


def _mm_cat4_kernel(a_ref, b_ref, o_ref, acc_ref):
    """Grid = (row_tiles, k_tiles).

    a_ref: (tm, tk) lhs tile, b_ref: (tk, N) rhs slab,
    o_ref: (tm, 4N) resident output block, acc_ref: (tm, N) f32 accumulator.
    """
    k = pl.program_id(1)

    @pl.when(k == 0)
    def _init():
        acc_ref[...] = jnp.zeros_like(acc_ref)

    # One MXU matmul per grid step, accumulated in f32.
    acc_ref[...] += jnp.dot(a_ref[...], b_ref[...],
                            preferred_element_type=jnp.float32)

    @pl.when(k == pl.num_programs(1) - 1)
    def _finalize():
        n = acc_ref.shape[1]
        y = acc_ref[...].astype(o_ref.dtype)      # cast only at writeback
        for r in range(4):                        # static, lane-aligned slabs
            o_ref[:, r * n:(r + 1) * n] = y


def _pick_tile(n, max_tile, unit):
    """Largest t <= max_tile with t % unit == 0 and n % t == 0; else full n."""
    if n % unit != 0:
        return n
    t = min(max_tile, n)
    t -= t % unit
    while t >= unit:
        if n % t == 0:
            return t
        t -= unit
    return n


def mm_cat4(x, *, tm=256, tk=512):
    n, m = x.shape
    assert n == m, "torch.mm(x, x) requires a square matrix"

    tm = _pick_tile(n, tm, 8)      # sublane-aligned row tile
    tk = _pick_tile(n, tk, 128)    # lane-aligned reduction tile
    grid = (n // tm, n // tk)

    bytes_el = jnp.dtype(x.dtype).itemsize
    # Double-buffered inputs + double-buffered output block + f32 accumulator.
    vmem_need = (2 * tm * tk * bytes_el           # lhs tiles
                 + 2 * tk * n * bytes_el          # rhs slabs
                 + 2 * tm * 4 * n * bytes_el      # output block
                 + tm * n * 4)                    # f32 accumulator
    vmem_limit = int(min(max(vmem_need + (4 << 20), 16 << 20), 64 << 20))

    cost = pl.CostEstimate(
        flops=2 * n * n * n,                            # matmul computed once
        transcendentals=0,
        bytes_accessed=(n * n * bytes_el                # lhs read once
                        + (n // tm) * n * n * bytes_el  # rhs re-read per row tile
                        + 4 * n * n * bytes_el),        # 4x replicated output write
    )

    return pl.pallas_call(
        _mm_cat4_kernel,
        out_shape=jax.ShapeDtypeStruct((n, 4 * n), x.dtype),
        grid_spec=pltpu.PrefetchScalarGridSpec(
            num_scalar_prefetch=0,
            grid=grid,
            in_specs=[
                pl.BlockSpec((tm, tk), lambda i, k: (i, k)),   # lhs row tiles
                pl.BlockSpec((tk, n), lambda i, k: (k, 0)),    # rhs (full width)
            ],
            out_specs=pl.BlockSpec((tm, 4 * n), lambda i, k: (i, 0)),
            scratch_shapes=[pltpu.VMEM((tm, n), jnp.float32)],
        ),
        compiler_params=pltpu.CompilerParams(
            dimension_semantics=("parallel", "arbitrary"),
            vmem_limit_bytes=vmem_limit,
        ),
        cost_estimate=cost,
    )(x, x)


if __name__ == "__main__":
    key = jax.random.PRNGKey(0)
    N = 256                         # small square matrix (module uses square x)
    x = jax.random.normal(key, (N, N), dtype=jnp.float32)

    # Small tiles so the (i, k) grid and the pl.when init/finalize paths are
    # actually exercised: grid = (2, 2).
    out = mm_cat4(x, tm=128, tk=128)
    out = jax.block_until_ready(out)

    # Reference check (plain JAX)
    ref = jnp.concatenate([x @ x] * 4, axis=1)
    assert out.shape == (N, 4 * N), out.shape
    assert jnp.allclose(out, ref, atol=1e-3, rtol=1e-3), "mismatch vs reference"

    print("KERNEL_OK")
</pallas_src>

<mosaic_0001>
module attributes {stable_mosaic.version = 11 : i64} {
  func.func @_mm_cat4_kernel(%arg0: i32, %arg1: i32, %arg2: memref<128x128xf32, #tpu.memory_space<vmem>>, %arg3: memref<128x256xf32, #tpu.memory_space<vmem>>, %arg4: memref<128x1024xf32, #tpu.memory_space<vmem>>, %arg5: memref<128x256xf32, #tpu.memory_space<vmem>>) attributes {dimension_semantics = [#tpu.dimension_semantics<parallel>, #tpu.dimension_semantics<arbitrary>], iteration_bounds = array<i64: 2, 2>, scalar_prefetch = 0 : i64, scratch_operands = 1 : i64, tpu.core_type = #tpu.core_type<tc>, window_params = [{transform_indices = @transform_0, window_bounds = array<i64: 128, 128>}, {transform_indices = @transform_1, window_bounds = array<i64: 128, 256>}, {transform_indices = @transform_2, window_bounds = array<i64: 128, 1024>}]} {
    %c0_i32 = arith.constant 0 : i32
    %0 = arith.cmpi eq, %arg1, %c0_i32 : i32
    %1 = arith.extui %0 : i1 to i32
    %c0_i32_0 = arith.constant 0 : i32
    %2 = arith.cmpi ne, %1, %c0_i32_0 : i32
    scf.if %2 {
      %cst_9 = arith.constant 0.000000e+00 : f32
      %12 = vector.broadcast %cst_9 : f32 to vector<128x256xf32>
      %c0_10 = arith.constant 0 : index
      %c0_11 = arith.constant 0 : index
      %13 = vector.load %arg5[%c0_10, %c0_11] : memref<128x256xf32, #tpu.memory_space<vmem>>, vector<128x256xf32>
      tpu.vector_store %arg5[%c0_10, %c0_11], %12 {strides = array<i32>} : memref<128x256xf32, #tpu.memory_space<vmem>>, vector<128x256xf32>,
    } else {
    }
    %c0 = arith.constant 0 : index
    %c0_1 = arith.constant 0 : index
    %3 = vector.load %arg5[%c0, %c0_1] : memref<128x256xf32, #tpu.memory_space<vmem>>, vector<128x256xf32>
    %c0_2 = arith.constant 0 : index
    %c0_3 = arith.constant 0 : index
    %4 = vector.load %arg2[%c0_2, %c0_3] : memref<128x128xf32, #tpu.memory_space<vmem>>, vector<128x128xf32>
    %c0_4 = arith.constant 0 : index
    %c0_5 = arith.constant 0 : index
    %5 = vector.load %arg3[%c0_4, %c0_5] : memref<128x256xf32, #tpu.memory_space<vmem>>, vector<128x256xf32>
    %cst = arith.constant dense<0.000000e+00> : vector<128x256xf32>
    %6 = tpu.matmul %4, %5, %cst {dimension_numbers = #tpu.dot_dimension_numbers<[1], [0], [0], [1], [0, 0, 1, 1], [], []>} : vector<128x128xf32>, vector<128x256xf32>, vector<128x256xf32> -> vector<128x256xf32>
    %7 = arith.addf %3, %6 : vector<128x256xf32>
    %c0_6 = arith.constant 0 : index
    %c0_7 = arith.constant 0 : index
    %8 = vector.load %arg5[%c0_6, %c0_7] : memref<128x256xf32, #tpu.memory_space<vmem>>, vector<128x256xf32>
    tpu.vector_store %arg5[%c0_6, %c0_7], %7 {strides = array<i32>} : memref<128x256xf32, #tpu.memory_space<vmem>>, vector<128x256xf32>,
    %c1_i32 = arith.constant 1 : i32
    %9 = arith.cmpi eq, %arg1, %c1_i32 : i32
    %10 = arith.extui %9 : i1 to i32
    %c0_i32_8 = arith.constant 0 : i32
    %11 = arith.cmpi ne, %10, %c0_i32_8 : i32
    scf.if %11 {
      %c0_9 = arith.constant 0 : index
      %c0_10 = arith.constant 0 : index
      %12 = vector.load %arg5[%c0_9, %c0_10] : memref<128x256xf32, #tpu.memory_space<vmem>>, vector<128x256xf32>
      %c0_11 = arith.constant 0 : index
      %c0_12 = arith.constant 0 : index
      %13 = vector.load %arg4[%c0_11, %c0_12] : memref<128x1024xf32, #tpu.memory_space<vmem>>, vector<128x256xf32>
      tpu.vector_store %arg4[%c0_11, %c0_12], %12 {strides = array<i32>} : memref<128x1024xf32, #tpu.memory_space<vmem>>, vector<128x256xf32>,
      %c0_13 = arith.constant 0 : index
      %c256 = arith.constant 256 : index
      %14 = vector.load %arg4[%c0_13, %c256] : memref<128x1024xf32, #tpu.memory_space<vmem>>, vector<128x256xf32>
      tpu.vector_store %arg4[%c0_13, %c256], %12 {strides = array<i32>} : memref<128x1024xf32, #tpu.memory_space<vmem>>, vector<128x256xf32>,
      %c0_14 = arith.constant 0 : index
      %c512 = arith.constant 512 : index
      %15 = vector.load %arg4[%c0_14, %c512] : memref<128x1024xf32, #tpu.memory_space<vmem>>, vector<128x256xf32>
      tpu.vector_store %arg4[%c0_14, %c512], %12 {strides = array<i32>} : memref<128x1024xf32, #tpu.memory_space<vmem>>, vector<128x256xf32>,
      %c0_15 = arith.constant 0 : index
      %c768 = arith.constant 768 : index
      %16 = vector.load %arg4[%c0_15, %c768] : memref<128x1024xf32, #tpu.memory_space<vmem>>, vector<128x256xf32>
      tpu.vector_store %arg4[%c0_15, %c768], %12 {strides = array<i32>} : memref<128x1024xf32, #tpu.memory_space<vmem>>, vector<128x256xf32>,
    } else {
    }
    return
  }
  func.func @transform_0(%arg0: i32, %arg1: i32) -> (i32, i32) {
    %c0_i32 = arith.constant 0 : i32
    return %arg0, %arg1 : i32, i32
  }
  func.func @transform_1(%arg0: i32, %arg1: i32) -> (i32, i32) {
    %c0_i32 = arith.constant 0 : i32
    %c0_i32_0 = arith.constant 0 : i32
    return %arg1, %c0_i32 : i32, i32
  }
  func.func @transform_2(%arg0: i32, %arg1: i32) -> (i32, i32) {
    %c0_i32 = arith.constant 0 : i32
    %c0_i32_0 = arith.constant 0 : i32
    return %arg0, %c0_i32 : i32, i32
  }
}

</mosaic_0001>

<llo_original>
// kernel: tpu_custom_call.1
$region0: #{tpu_custom_call.1}
  #allocation0 [shape = 'u32[]', space=smem, size = 0x4, offset = 0x4, fixed_abs, tag = 'smem constant byte address 0x4 - core index']
  #allocation1 [shape = 'u32[144,128]{1,0:T(1,128)}', space=vmem, size = 0x12000, scoped, tag = 'internal scratch']
  #allocation2 [shape = 'f32[128,256]{1,0:T(8,128)}', space=vmem, size = 0x20000, scoped, tag = 'scratch operand']
  %s0 = inlined_call_operand.hbm [shape: f32[256,256], index: 0, kind: input, shape index: {}]
  %s1 = inlined_call_operand.hbm [shape: f32[256,256], index: 1, kind: input, shape index: {}]
  %s2 = inlined_call_operand.hbm [shape: f32[256,1024], index: 2, kind: output, shape index: {}]
  %s3 = sld [smem:[#allocation0]]
  $region57: #{tpu_custom_call.1} parent=0
    _
  %s5 = ssub.s32 1, %s3
  %s6 = scalar_select 0, %s5, %s3
  $region1: #{tpu_custom_call.1} parent=0
    #allocation3 [shape = 'u8[131072]{0}', space=vmem, size = 0x20000, scoped, tag = 'input window, operand 0']
    #allocation4 [shape = 's32[2]{0}', space=sflag, size = 0x8, scoped, tag = 'scoped memory for tpu_custom_call.1']
    #allocation5 [shape = 's32[2]{0}', space=sflag, size = 0x8, scoped, tag = 'scoped memory for tpu_custom_call.1']
    #allocation6 [shape = 'u8[262144]{0}', space=vmem, size = 0x40000, scoped, tag = 'input window, operand 1']
    #allocation7 [shape = 's32[2]{0}', space=sflag, size = 0x8, scoped, tag = 'scoped memory for tpu_custom_call.1']
    #allocation8 [shape = 'u8[1048576]{0}', space=vmem, size = 0x100000, scoped, tag = 'output window, operand 0']
    %7 = vsyncpa [#allocation4], 0
    %s8 = scalar_lea.sflag [#allocation4], 1
    %9 = vsyncpa %s8, 0
    %10 = vsyncpa [#allocation7], 0
    %s11 = scalar_lea.sflag [#allocation7], 1
    %12 = vsyncpa %s11, 0
    %13 = vsyncpa [#allocation5], 0
    %s14 = scalar_lea.sflag [#allocation5], 1
    %15 = vsyncpa %s14, 0
    loop: start=0, step=1, limit=6
    $region2: #{tpu_custom_call.1} parent=1 // loop_pre_header
      _
    $region3: #{tpu_custom_call.1} parent=1 // loop_header
      %s17 = sphi 0, %s21
      %p18 = scmp.ge.s32.totalorder %s17, 6
      %s24 = sphi 0, %s36
      %s25 = sphi 0, %s32
      %s26 = sphi 0, %s24
      %s27 = sphi 0, %s25
      %s28 = sphi 0, %s26
      %s29 = sphi 0, %s27
      %s41 = sphi 0, %s43
      %s44 = sphi 0, %s41
      %s45 = sphi 0, %s44
      %s61 = sphi 0, %s45
      %s67 = sphi 0, %s69
      %s70 = sphi 0, %s67
      %s71 = sphi 0, %s70
      %s87 = sphi 0, %s71
      %s93 = sphi 0, %s95
      %s96 = sphi 0, %s93
      %s97 = sphi 0, %s96
      %s113 = sphi 0, %s97
    $region4: #{tpu_custom_call.1} parent=1 // loop_header_branch
      %20 = sbr.rel (%p18) target = $region8
    $region5: #{tpu_custom_call.1} parent=1 // loop_body
      %s22 = ssub.s32 %s17, 1
      %s23 = ssub.s32 %s17, 2
      %s30 = sadd.s32 1, %s25
      %p31 = scmp.ge.s32.totalorder %s30, 2
      %s32 = scalar_select %p31, 0, %s30
      %s33 = sadd.s32 1, %s24
      %s34 = scalar_select %p31, %s33, %s24
      %p35 = scmp.ge.s32.totalorder %s34, 2
      %s36 = scalar_select %p35, 0, %s34
      %s37 = ssub.s32 %s24, %s36
      %s38 = ssub.s32 %s25, %s32
      %s39 = sor.u32 %s37, %s38
      %p40 = scmp.eq.s32.totalorder %s39, 0
      %s42 = sadd.s32 %s41, 1
      %s43 = scalar_select %p40, %s41, %s42
      %p46 = pneg %p40
      %p47 = scmp.eq.s32.totalorder %s17, 3
      %p48 = por %p46, %p47
      %p49 = scmp.ne.s32.totalorder %s41, %s44
      %p50 = scmp.eq.s32.totalorder %s17, 0
      %p51 = por %p49, %p50
      %p52 = scmp.ne.s32.totalorder %s41, %s44
      %p53 = scmp.eq.s32.totalorder %s22, 3
      %p54 = por %p52, %p53
      %p55 = scmp.ne.s32.totalorder %s44, %s45
      %p56 = scmp.eq.s32.totalorder %s22, 0
      %p57 = por %p55, %p56
      %p58 = scmp.ne.s32.totalorder %s44, %s45
      %p59 = scmp.eq.s32.totalorder %s23, 3
      %p60 = por %p58, %p59
      %p62 = scmp.ne.s32.totalorder %s45, %s61
      %p63 = scmp.eq.s32.totalorder %s23, 0
      %p64 = por %p62, %p63
      %s65 = ssub.s32 %s25, %s32
      %p66 = scmp.eq.s32.totalorder %s65, 0
      %s68 = sadd.s32 %s67, 1
      %s69 = scalar_select %p66, %s67, %s68
      %p72 = pneg %p66
      %p73 = scmp.eq.s32.totalorder %s17, 3
      %p74 = por %p72, %p73
      %p75 = scmp.ne.s32.totalorder %s67, %s70
      %p76 = scmp.eq.s32.totalorder %s17, 0
      %p77 = por %p75, %p76
      %p78 = scmp.ne.s32.totalorder %s67, %s70
      %p79 = scmp.eq.s32.totalorder %s22, 3
      %p80 = por %p78, %p79
      %p81 = scmp.ne.s32.totalorder %s70, %s71
      %p82 = scmp.eq.s32.totalorder %s22, 0
      %p83 = por %p81, %p82
      %p84 = scmp.ne.s32.totalorder %s70, %s71
      %p85 = scmp.eq.s32.totalorder %s23, 3
      %p86 = por %p84, %p85
      %p88 = scmp.ne.s32.totalorder %s71, %s87
      %p89 = scmp.eq.s32.totalorder %s23, 0
      %p90 = por %p88, %p89
      %s91 = ssub.s32 %s24, %s36
      %p92 = scmp.eq.s32.totalorder %s91, 0
      %s94 = sadd.s32 %s93, 1
      %s95 = scalar_select %p92, %s93, %s94
      %p98 = pneg %p92
      %p99 = scmp.eq.s32.totalorder %s17, 3
      %p100 = por %p98, %p99
      %p101 = scmp.ne.s32.totalorder %s93, %s96
      %p102 = scmp.eq.s32.totalorder %s17, 0
      %p103 = por %p101, %p102
      %p104 = scmp.ne.s32.totalorder %s93, %s96
      %p105 = scmp.eq.s32.totalorder %s22, 3
      %p106 = por %p104, %p105
      %p107 = scmp.ne.s32.totalorder %s96, %s97
      %p108 = scmp.eq.s32.totalorder %s22, 0
      %p109 = por %p107, %p108
      %p110 = scmp.ne.s32.totalorder %s96, %s97
      %p111 = scmp.eq.s32.totalorder %s23, 3
      %p112 = por %p110, %p111
      %p114 = scmp.ne.s32.totalorder %s97, %s113
      %p115 = scmp.eq.s32.totalorder %s23, 0
      %p116 = por %p114, %p115
      %p117 = scmp.le.s32.totalorder 1, %s17
      %p118 = scmp.lt.s32.totalorder %s17, 5
      %p119 = pnand %p117, %p118
      %p120 = pneg %p119
      // Predicated region
      $region9: #{tpu_custom_call.1} parent=5 // pred_check
        _
      $region10: #{tpu_custom_call.1} parent=5 // pred_check_branch
        %122 = sbr.rel (%p119) target = $region12
      $region11: #{tpu_custom_call.1} parent=5 // pred_region
        %s123 = ssub.s32 %s17, 1
      $region12: #{tpu_custom_call.1} parent=5 // pred_fallthru
        _
      %p124 = scmp.lt.s32.totalorder %s17, 4
      // Predicated region
      $region13: #{tpu_custom_call.1} parent=5 // pred_check
        %p125 = pneg %p124
      $region14: #{tpu_custom_call.1} parent=5 // pred_check_branch
        %127 = sbr.rel (%p125) target = $region16
      $region15: #{tpu_custom_call.1} parent=5 // pred_region
        // Predicated region
        $region17: #{tpu_custom_call.1} parent=15 // pred_check
          %p128 = pneg %p51
        $region18: #{tpu_custom_call.1} parent=15 // pred_check_branch
          %130 = sbr.rel (%p128) target = $region20
        $region19: #{tpu_custom_call.1} parent=15 // pred_region
          %s131 = sand.u32 %s41, 1
          %s132 = scalar_lea.sflag [#allocation4], %s131
          %s133 = sand.u32 %s41, 1
          %s134 = smul.addr %s133, 128
          %s135 = scalar_lea.vmem [#allocation3], %s134
          %s136 = smul.u32 16, %s24
          %s138 = ssub.s32 2048, 2048
          %139 = vsyncadd %s132, %s138
          %s140 = smul.addr %s136, 2
          %s141 = sadd.s32 %s25, %s140
          %s142 = smul.addr %s141, 128
          %s143 = scalar_lea.hbm %s0, %s142
          %s144 = sshll.u32 %s135, 4
          %s145 = int_to_ptr.vmem [resolvable:$true] %s144
          %150 = dma.hbm_to_vmem [thread:$0]  %s143, 2048, %s145, %s132, 256, 128, 8
        $region20: #{tpu_custom_call.1} parent=15 // pred_fallthru
          _
        // Predicated region
        $region21: #{tpu_custom_call.1} parent=15 // pred_check
          %p151 = pneg %p77
        $region22: #{tpu_custom_call.1} parent=15 // pred_check_branch
          %153 = sbr.rel (%p151) target = $region24
        $region23: #{tpu_custom_call.1} parent=15 // pred_region
          %s154 = sand.u32 %s67, 1
          %s155 = scalar_lea.sflag [#allocation7], %s154
          %s156 = sand.u32 %s67, 1
          %s157 = smul.addr %s156, 256
          %s158 = scalar_lea.vmem [#allocation6], %s157
          %s159 = smul.u32 16, %s25
          %s161 = ssub.s32 4096, 4096
          %162 = vsyncadd %s155, %s161
          %s163 = smul.addr %s159, 2
          %s164 = smul.addr %s163, 128
          %s165 = scalar_lea.hbm %s1, %s164
          %s166 = sshll.u32 %s158, 4
          %s167 = int_to_ptr.vmem [resolvable:$true] %s166
          %172 = dma.hbm_to_vmem [thread:$0]  %s165, 4096, %s167, %s155, 256, 256, 16
        $region24: #{tpu_custom_call.1} parent=15 // pred_fallthru
          _
      $region16: #{tpu_custom_call.1} parent=5 // pred_fallthru
        _
      %p173 = scmp.le.s32.totalorder 1, %s17
      %p174 = scmp.lt.s32.totalorder %s17, 5
      %p175 = pnand %p173, %p174
      %p176 = pneg %p175
      // Predicated region
      $region25: #{tpu_custom_call.1} parent=5 // pred_check
        _
      $region26: #{tpu_custom_call.1} parent=5 // pred_check_branch
        %178 = sbr.rel (%p175) target = $region28
      $region27: #{tpu_custom_call.1} parent=5 // pred_region
        %s179 = ssub.s32 %s17, 1
        %s180 = sand.u32 %s44, 1
        %s181 = scalar_lea.sflag [#allocation4], %s180
        %s182 = sand.u32 %s44, 1
        %s183 = smul.addr %s182, 128
        %s184 = scalar_lea.vmem [#allocation3], %s183
        // Predicated region
        $region29: #{tpu_custom_call.1} parent=27 // pred_check
          %p185 = pneg %p57
        $region30: #{tpu_custom_call.1} parent=27 // pred_check_branch
          %187 = sbr.rel (%p185) target = $region32
        $region31: #{tpu_custom_call.1} parent=27 // pred_region
          %188 = dma.done %s181, 2048
        $region32: #{tpu_custom_call.1} parent=27 // pred_fallthru
          _
        %s189 = sand.u32 %s70, 1
        %s190 = scalar_lea.sflag [#allocation7], %s189
        %s191 = sand.u32 %s70, 1
        %s192 = smul.addr %s191, 256
        %s193 = scalar_lea.vmem [#allocation6], %s192
        // Predicated region
        $region33: #{tpu_custom_call.1} parent=27 // pred_check
          %p194 = pneg %p83
        $region34: #{tpu_custom_call.1} parent=27 // pred_check_branch
          %196 = sbr.rel (%p194) target = $region36
        $region35: #{tpu_custom_call.1} parent=27 // pred_region
          %197 = dma.done %s190, 4096
        $region36: #{tpu_custom_call.1} parent=27 // pred_fallthru
          _
        %s198 = sand.u32 %s44, 1
        %s199 = scalar_lea.sflag [#allocation4], %s198
        %s200 = sand.u32 %s44, 1
        %s201 = smul.addr %s200, 128
        %s202 = scalar_lea.vmem [#allocation3], %s201
        %p203 = pneg %p57
        %p204 = pneg %p54
        %s205 = sand.u32 %s70, 1
        %s206 = scalar_lea.sflag [#allocation7], %s205
        %s207 = sand.u32 %s70, 1
        %s208 = smul.addr %s207, 256
        %s209 = scalar_lea.vmem [#allocation6], %s208
        %p210 = pneg %p83
        %p211 = pneg %p80
        %p212 = pneg %p109
        %p213 = pneg %p106
        %s214 = sand.u32 %s96, 1
        %s215 = scalar_lea.sflag [#allocation5], %s214
        %s216 = sand.u32 %s96, 1
        %s217 = smul.addr %s216, 1024
        %s218 = scalar_lea.vmem [#allocation8], %s217
        %s219 = smul.u32 16, %s26
        %s220 = smul.u32 16, %s27
        %s221 = smul.u32 16, %s26
        %p222 = scmp.eq.s32.totalorder %s27, 0
        // Predicated region
        $region37: #{tpu_custom_call.1} parent=27 // pred_check
          %p223 = pneg %p222
        $region38: #{tpu_custom_call.1} parent=27 // pred_check_branch
          %225 = sbr.rel (%p223) target = $region40
        $region39: #{tpu_custom_call.1} parent=27 // pred_region
          %226 = vst [vmem:[#allocation2] sm:$0xff] 0.0
          %227 = vst [vmem:[#allocation2 + $0x8] sm:$0xff] 0.0
          %228 = vst [vmem:[#allocation2 + $0x10] sm:$0xff] 0.0
          %229 = vst [vmem:[#allocation2 + $0x18] sm:$0xff] 0.0
          %230 = vst [vmem:[#allocation2 + $0x20] sm:$0xff] 0.0
          %231 = vst [vmem:[#allocation2 + $0x28] sm:$0xff] 0.0
          %232 = vst [vmem:[#allocation2 + $0x30] sm:$0xff] 0.0
          %233 = vst [vmem:[#allocation2 + $0x38] sm:$0xff] 0.0
          %234 = vst [vmem:[#allocation2 + $0x40] sm:$0xff] 0.0
          %235 = vst [vmem:[#allocation2 + $0x48] sm:$0xff] 0.0
          %236 = vst [vmem:[#allocation2 + $0x50] sm:$0xff] 0.0
          %237 = vst [vmem:[#allocation2 + $0x58] sm:$0xff] 0.0
          %238 = vst [vmem:[#allocation2 + $0x60] sm:$0xff] 0.0
          %239 = vst [vmem:[#allocation2 + $0x68] sm:$0xff] 0.0
          %240 = vst [vmem:[#allocation2 + $0x70] sm:$0xff] 0.0
          %241 = vst [vmem:[#allocation2 + $0x78] sm:$0xff] 0.0
          %242 = vst [vmem:[#allocation2 + $0x80] sm:$0xff] 0.0
          %243 = vst [vmem:[#allocation2 + $0x88] sm:$0xff] 0.0
          %244 = vst [vmem:[#allocation2 + $0x90] sm:$0xff] 0.0
          %245 = vst [vmem:[#allocation2 + $0x98] sm:$0xff] 0.0
          %246 = vst [vmem:[#allocation2 + $0xa0] sm:$0xff] 0.0
          %247 = vst [vmem:[#allocation2 + $0xa8] sm:$0xff] 0.0
          %248 = vst [vmem:[#allocation2 + $0xb0] sm:$0xff] 0.0
          %249 = vst [vmem:[#allocation2 + $0xb8] sm:$0xff] 0.0
          %250 = vst [vmem:[#allocation2 + $0xc0] sm:$0xff] 0.0
          %251 = vst [vmem:[#allocation2 + $0xc8] sm:$0xff] 0.0
          %252 = vst [vmem:[#allocation2 + $0xd0] sm:$0xff] 0.0
          %253 = vst [vmem:[#allocation2 + $0xd8] sm:$0xff] 0.0
          %254 = vst [vmem:[#allocation2 + $0xe0] sm:$0xff] 0.0
          %255 = vst [vmem:[#allocation2 + $0xe8] sm:$0xff] 0.0
          %256 = vst [vmem:[#allocation2 + $0xf0] sm:$0xff] 0.0
          %257 = vst [vmem:[#allocation2 + $0xf8] sm:$0xff] 0.0
        $region40: #{tpu_custom_call.1} parent=27 // pred_fallthru
          _
        %v258 = vld [vmem:[#allocation2] sm:$0xff]
        %v259 = vld [vmem:[#allocation2 + $0x8] sm:$0xff]
        %v260 = vld [vmem:[#allocation2 + $0x10] sm:$0xff]
        %v261 = vld [vmem:[#allocation2 + $0x18] sm:$0xff]
        %v262 = vld [vmem:[#allocation2 + $0x20] sm:$0xff]
        %v263 = vld [vmem:[#allocation2 + $0x28] sm:$0xff]
        %v264 = vld [vmem:[#allocation2 + $0x30] sm:$0xff]
        %v265 = vld [vmem:[#allocation2 + $0x38] sm:$0xff]
        %v266 = vld [vmem:[#allocation2 + $0x40] sm:$0xff]
        %v267 = vld [vmem:[#allocation2 + $0x48] sm:$0xff]
        %v268 = vld [vmem:[#allocation2 + $0x50] sm:$0xff]
        %v269 = vld [vmem:[#allocation2 + $0x58] sm:$0xff]
        %v270 = vld [vmem:[#allocation2 + $0x60] sm:$0xff]
        %v271 = vld [vmem:[#allocation2 + $0x68] sm:$0xff]
        %v272 = vld [vmem:[#allocation2 + $0x70] sm:$0xff]
        %v273 = vld [vmem:[#allocation2 + $0x78] sm:$0xff]
        %v274 = vld [vmem:[#allocation2 + $0x80] sm:$0xff]
        %v275 = vld [vmem:[#allocation2 + $0x88] sm:$0xff]
        %v276 = vld [vmem:[#allocation2 + $0x90] sm:$0xff]
        %v277 = vld [vmem:[#allocation2 + $0x98] sm:$0xff]
        %v278 = vld [vmem:[#allocation2 + $0xa0] sm:$0xff]
        %v279 = vld [vmem:[#allocation2 + $0xa8] sm:$0xff]
        %v280 = vld [vmem:[#allocation2 + $0xb0] sm:$0xff]
        %v281 = vld [vmem:[#allocation2 + $0xb8] sm:$0xff]
        %v282 = vld [vmem:[#allocation2 + $0xc0] sm:$0xff]
        %v283 = vld [vmem:[#allocation2 + $0xc8] sm:$0xff]
        %v284 = vld [vmem:[#allocation2 + $0xd0] sm:$0xff]
        %v285 = vld [vmem:[#allocation2 + $0xd8] sm:$0xff]
        %v286 = vld [vmem:[#allocation2 + $0xe0] sm:$0xff]
        %v287 = vld [vmem:[#allocation2 + $0xe8] sm:$0xff]
        %v288 = vld [vmem:[#allocation2 + $0xf0] sm:$0xff]
        %v289 = vld [vmem:[#allocation2 + $0xf8] sm:$0xff]
        %v290 = vld [vmem:[%s184] sm:$0xff]
        %v291 = vld [vmem:[%s184 + $0x8] sm:$0xff]
        %v292 = vld [vmem:[%s184 + $0x10] sm:$0xff]
        %v293 = vld [vmem:[%s184 + $0x18] sm:$0xff]
        %v294 = vld [vmem:[%s184 + $0x20] sm:$0xff]
        %v295 = vld [vmem:[%s184 + $0x28] sm:$0xff]
        %v296 = vld [vmem:[%s184 + $0x30] sm:$0xff]
        %v297 = vld [vmem:[%s184 + $0x38] sm:$0xff]
        %v298 = vld [vmem:[%s184 + $0x40] sm:$0xff]
        %v299 = vld [vmem:[%s184 + $0x48] sm:$0xff]
        %v300 = vld [vmem:[%s184 + $0x50] sm:$0xff]
        %v301 = vld [vmem:[%s184 + $0x58] sm:$0xff]
        %v302 = vld [vmem:[%s184 + $0x60] sm:$0xff]
        %v303 = vld [vmem:[%s184 + $0x68] sm:$0xff]
        %v304 = vld [vmem:[%s184 + $0x70] sm:$0xff]
        %v305 = vld [vmem:[%s184 + $0x78] sm:$0xff]
        %v306 = vld [vmem:[%s193] sm:$0xff]
        %v307 = vld [vmem:[%s193 + $0x8] sm:$0xff]
        %v308 = vld [vmem:[%s193 + $0x10] sm:$0xff]
        %v309 = vld [vmem:[%s193 + $0x18] sm:$0xff]
        %v310 = vld [vmem:[%s193 + $0x20] sm:$0xff]
        %v311 = vld [vmem:[%s193 + $0x28] sm:$0xff]
        %v312 = vld [vmem:[%s193 + $0x30] sm:$0xff]
        %v313 = vld [vmem:[%s193 + $0x38] sm:$0xff]
        %v314 = vld [vmem:[%s193 + $0x40] sm:$0xff]
        %v315 = vld [vmem:[%s193 + $0x48] sm:$0xff]
        %v316 = vld [vmem:[%s193 + $0x50] sm:$0xff]
        %v317 = vld [vmem:[%s193 + $0x58] sm:$0xff]
        %v318 = vld [vmem:[%s193 + $0x60] sm:$0xff]
        %v319 = vld [vmem:[%s193 + $0x68] sm:$0xff]
        %v320 = vld [vmem:[%s193 + $0x70] sm:$0xff]
        %v321 = vld [vmem:[%s193 + $0x78] sm:$0xff]
        %v322 = vld [vmem:[%s193 + $0x80] sm:$0xff]
        %v323 = vld [vmem:[%s193 + $0x88] sm:$0xff]
        %v324 = vld [vmem:[%s193 + $0x90] sm:$0xff]
        %v325 = vld [vmem:[%s193 + $0x98] sm:$0xff]
        %v326 = vld [vmem:[%s193 + $0xa0] sm:$0xff]
        %v327 = vld [vmem:[%s193 + $0xa8] sm:$0xff]
        %v328 = vld [vmem:[%s193 + $0xb0] sm:$0xff]
        %v329 = vld [vmem:[%s193 + $0xb8] sm:$0xff]
        %v330 = vld [vmem:[%s193 + $0xc0] sm:$0xff]
        %v331 = vld [vmem:[%s193 + $0xc8] sm:$0xff]
        %v332 = vld [vmem:[%s193 + $0xd0] sm:$0xff]
        %v333 = vld [vmem:[%s193 + $0xd8] sm:$0xff]
        %v334 = vld [vmem:[%s193 + $0xe0] sm:$0xff]
        %v335 = vld [vmem:[%s193 + $0xe8] sm:$0xff]
        %v336 = vld [vmem:[%s193 + $0xf0] sm:$0xff]
        %v337 = vld [vmem:[%s193 + $0xf8] sm:$0xff]
        %338 = vmatprep.subr.mxu0 %v307
        %339 = vmatpush1.msra.mxu0 %v306
        %340 = vmatprep.subr.mxu0 %v309
        %341 = vmatpush1.msra.mxu0 %v308
        %342 = vmatprep.subr.mxu0 %v311
        %343 = vmatpush1.msra.mxu0 %v310
        %344 = vmatprep.subr.mxu0 %v313
        %345 = vmatpush1.msra.mxu0 %v312
        %346 = vmatprep.subr.mxu0 %v315
        %347 = vmatpush1.msra.mxu0 %v314
        %348 = vmatprep.subr.mxu0 %v317
        %349 = vmatpush1.msra.mxu0 %v316
        %350 = vmatprep.subr.mxu0 %v319
        %351 = vmatpush1.msra.mxu0 %v318
        %352 = vmatprep.subr.mxu0 %v321
        %353 = vmatpush1.msra.mxu0 %v320
        %354 = vmatprep.subr.mxu0 %v323
        %355 = vmatpush1.msra.mxu0 %v322
        %356 = vmatprep.subr.mxu0 %v325
        %357 = vmatpush1.msra.mxu0 %v324
        %358 = vmatprep.subr.mxu0 %v327
        %359 = vmatpush1.msra.mxu0 %v326
        %360 = vmatprep.subr.mxu0 %v329
        %361 = vmatpush1.msra.mxu0 %v328
        %362 = vmatprep.subr.mxu0 %v331
        %363 = vmatpush1.msra.mxu0 %v330
        %364 = vmatprep.subr.mxu0 %v333
        %365 = vmatpush1.msra.mxu0 %v332
        %366 = vmatprep.subr.mxu0 %v335
        %367 = vmatpush1.msra.mxu0 %v334
        %368 = vmatprep.subr.mxu0 %v337
        %369 = vmatpush1.msra.mxu0 %v336
        %370 = vmatprep.subr.mxu0 0.0
        %371 = vmatpush1.msra.mxu0 0.0
        %372 = vmatprep.subr.mxu0 0.0
        %373 = vmatpush1.msra.mxu0 0.0
        %374 = vmatprep.subr.mxu0 0.0
        %375 = vmatpush1.msra.mxu0 0.0
        %376 = vmatprep.subr.mxu0 0.0
        %377 = vmatpush1.msra.mxu0 0.0
        %378 = vmatprep.subr.mxu0 0.0
        %379 = vmatpush1.msra.mxu0 0.0
        %380 = vmatprep.subr.mxu0 0.0
        %381 = vmatpush1.msra.mxu0 0.0
        %382 = vmatprep.subr.mxu0 0.0
        %383 = vmatpush1.msra.mxu0 0.0
        %384 = vmatprep.subr.mxu0 0.0
        %385 = vmatpush1.msra.mxu0 0.0
        %386 = vmatprep.subr.mxu0 0.0
        %387 = vmatpush1.msra.mxu0 0.0
        %388 = vmatprep.subr.mxu0 0.0
        %389 = vmatpush1.msra.mxu0 0.0
        %390 = vmatprep.subr.mxu0 0.0
        %391 = vmatpush1.msra.mxu0 0.0
        %392 = vmatprep.subr.mxu0 0.0
        %393 = vmatpush1.msra.mxu0 0.0
        %394 = vmatprep.subr.mxu0 0.0
        %395 = vmatpush1.msra.mxu0 0.0
        %396 = vmatprep.subr.mxu0 0.0
        %397 = vmatpush1.msra.mxu0 0.0
        %398 = vmatprep.subr.mxu0 0.0
        %399 = vmatpush1.msra.mxu0 0.0
        %400 = vmatprep.subr.mxu0 0.0
        %401 = vmatpush1.msra.mxu0 0.0
        %402 = vmatprep.mubr.f32.mxu0 0.0
        %403 = vmatmul.mubr.f32.gmra.mrb[0].mxu0 %v290
        %v404 = vpop.f32.mrb[0].mxu0
        %v405 = vadd.f32 0.0, %v404
        %v406 = vpop.f32.mrb[0].mxu0
        %v407 = vadd.f32 0.0, %v406
        %408 = vmatprep.mubr.f32.mxu0 0.0
        %409 = vmatmul.mubr.f32.gmra.mrb[0].mxu0 %v291
        %v410 = vpop.f32.mrb[0].mxu0
        %v411 = vadd.f32 0.0, %v410
        %v412 = vpop.f32.mrb[0].mxu0
        %v413 = vadd.f32 0.0, %v412
        %414 = vmatprep.mubr.f32.mxu0 0.0
        %415 = vmatmul.mubr.f32.gmra.mrb[0].mxu0 %v292
        %v416 = vpop.f32.mrb[0].mxu0
        %v417 = vadd.f32 0.0, %v416
        %v418 = vpop.f32.mrb[0].mxu0
        %v419 = vadd.f32 0.0, %v418
        %420 = vmatprep.mubr.f32.mxu0 0.0
        %421 = vmatmul.mubr.f32.gmra.mrb[0].mxu0 %v293
        %v422 = vpop.f32.mrb[0].mxu0
        %v423 = vadd.f32 0.0, %v422
        %v424 = vpop.f32.mrb[0].mxu0
        %v425 = vadd.f32 0.0, %v424
        %426 = vmatprep.mubr.f32.mxu0 0.0
        %427 = vmatmul.mubr.f32.gmra.mrb[0].mxu0 %v294
        %v428 = vpop.f32.mrb[0].mxu0
        %v429 = vadd.f32 0.0, %v428
        %v430 = vpop.f32.mrb[0].mxu0
        %v431 = vadd.f32 0.0, %v430
        %432 = vmatprep.mubr.f32.mxu0 0.0
        %433 = vmatmul.mubr.f32.gmra.mrb[0].mxu0 %v295
        %v434 = vpop.f32.mrb[0].mxu0
        %v435 = vadd.f32 0.0, %v434
        %v436 = vpop.f32.mrb[0].mxu0
        %v437 = vadd.f32 0.0, %v436
        %438 = vmatprep.mubr.f32.mxu0 0.0
        %439 = vmatmul.mubr.f32.gmra.mrb[0].mxu0 %v296
        %v440 = vpop.f32.mrb[0].mxu0
        %v441 = vadd.f32 0.0, %v440
        %v442 = vpop.f32.mrb[0].mxu0
        %v443 = vadd.f32 0.0, %v442
        %444 = vmatprep.mubr.f32.mxu0 0.0
        %445 = vmatmul.mubr.f32.gmra.mrb[0].mxu0 %v297
        %v446 = vpop.f32.mrb[0].mxu0
        %v447 = vadd.f32 0.0, %v446
        %v448 = vpop.f32.mrb[0].mxu0
        %v449 = vadd.f32 0.0, %v448
        %450 = vmatprep.mubr.f32.mxu0 0.0
        %451 = vmatmul.mubr.f32.gmra.mrb[0].mxu0 %v298
        %v452 = vpop.f32.mrb[0].mxu0
        %v453 = vadd.f32 0.0, %v452
        %v454 = vpop.f32.mrb[0].mxu0
        %v455 = vadd.f32 0.0, %v454
        %456 = vmatprep.mubr.f32.mxu0 0.0
        %457 = vmatmul.mubr.f32.gmra.mrb[0].mxu0 %v299
        %v458 = vpop.f32.mrb[0].mxu0
        %v459 = vadd.f32 0.0, %v458
        %v460 = vpop.f32.mrb[0].mxu0
        %v461 = vadd.f32 0.0, %v460
        %462 = vmatprep.mubr.f32.mxu0 0.0
        %463 = vmatmul.mubr.f32.gmra.mrb[0].mxu0 %v300
        %v464 = vpop.f32.mrb[0].mxu0
        %v465 = vadd.f32 0.0, %v464
        %v466 = vpop.f32.mrb[0].mxu0
        %v467 = vadd.f32 0.0, %v466
        %468 = vmatprep.mubr.f32.mxu0 0.0
        %469 = vmatmul.mubr.f32.gmra.mrb[0].mxu0 %v301
        %v470 = vpop.f32.mrb[0].mxu0
        %v471 = vadd.f32 0.0, %v470
        %v472 = vpop.f32.mrb[0].mxu0
        %v473 = vadd.f32 0.0, %v472
        %474 = vmatprep.mubr.f32.mxu0 0.0
        %475 = vmatmul.mubr.f32.gmra.mrb[0].mxu0 %v302
        %v476 = vpop.f32.mrb[0].mxu0
        %v477 = vadd.f32 0.0, %v476
        %v478 = vpop.f32.mrb[0].mxu0
        %v479 = vadd.f32 0.0, %v478
        %480 = vmatprep.mubr.f32.mxu0 0.0
        %481 = vmatmul.mubr.f32.gmra.mrb[0].mxu0 %v303
        %v482 = vpop.f32.mrb[0].mxu0
        %v483 = vadd.f32 0.0, %v482
        %v484 = vpop.f32.mrb[0].mxu0
        %v485 = vadd.f32 0.0, %v484
        %486 = vmatprep.mubr.f32.mxu0 0.0
        %487 = vmatmul.mubr.f32.gmra.mrb[0].mxu0 %v304
        %v488 = vpop.f32.mrb[0].mxu0
        %v489 = vadd.f32 0.0, %v488
        %v490 = vpop.f32.mrb[0].mxu0
        %v491 = vadd.f32 0.0, %v490
        %492 = vmatprep.mubr.f32.mxu0 0.0
        %493 = vmatmul.mubr.f32.gmra.mrb[0].mxu0 %v305
        %v494 = vpop.f32.mrb[0].mxu0
        %v495 = vadd.f32 0.0, %v494
        %v496 = vpop.f32.mrb[0].mxu0
        %v497 = vadd.f32 0.0, %v496
        %498 = vdwg.mxu0
        %v499 = vadd.f32 %v258, %v405
        %v500 = vadd.f32 %v259, %v407
        %v501 = vadd.f32 %v260, %v411
        %v502 = vadd.f32 %v261, %v413
        %v503 = vadd.f32 %v262, %v417
        %v504 = vadd.f32 %v263, %v419
        %v505 = vadd.f32 %v264, %v423
        %v506 = vadd.f32 %v265, %v425
        %v507 = vadd.f32 %v266, %v429
        %v508 = vadd.f32 %v267, %v431
        %v509 = vadd.f32 %v268, %v435
        %v510 = vadd.f32 %v269, %v437
        %v511 = vadd.f32 %v270, %v441
        %v512 = vadd.f32 %v271, %v443
        %v513 = vadd.f32 %v272, %v447
        %v514 = vadd.f32 %v273, %v449
        %v515 = vadd.f32 %v274, %v453
        %v516 = vadd.f32 %v275, %v455
        %v517 = vadd.f32 %v276, %v459
        %v518 = vadd.f32 %v277, %v461
        %v519 = vadd.f32 %v278, %v465
        %v520 = vadd.f32 %v279, %v467
        %v521 = vadd.f32 %v280, %v471
        %v522 = vadd.f32 %v281, %v473
        %v523 = vadd.f32 %v282, %v477
        %v524 = vadd.f32 %v283, %v479
        %v525 = vadd.f32 %v284, %v483
        %v526 = vadd.f32 %v285, %v485
        %v527 = vadd.f32 %v286, %v489
        %v528 = vadd.f32 %v287, %v491
        %v529 = vadd.f32 %v288, %v495
        %v530 = vadd.f32 %v289, %v497
        %531 = vst [vmem:[#allocation2] sm:$0xff] %v499
        %532 = vst [vmem:[#allocation2 + $0x8] sm:$0xff] %v500
        %533 = vst [vmem:[#allocation2 + $0x10] sm:$0xff] %v501
        %534 = vst [vmem:[#allocation2 + $0x18] sm:$0xff] %v502
        %535 = vst [vmem:[#allocation2 + $0x20] sm:$0xff] %v503
        %536 = vst [vmem:[#allocation2 + $0x28] sm:$0xff] %v504
        %537 = vst [vmem:[#allocation2 + $0x30] sm:$0xff] %v505
        %538 = vst [vmem:[#allocation2 + $0x38] sm:$0xff] %v506
        %539 = vst [vmem:[#allocation2 + $0x40] sm:$0xff] %v507
        %540 = vst [vmem:[#allocation2 + $0x48] sm:$0xff] %v508
        %541 = vst [vmem:[#allocation2 + $0x50] sm:$0xff] %v509
        %542 = vst [vmem:[#allocation2 + $0x58] sm:$0xff] %v510
        %543 = vst [vmem:[#allocation2 + $0x60] sm:$0xff] %v511
        %544 = vst [vmem:[#allocation2 + $0x68] sm:$0xff] %v512
        %545 = vst [vmem:[#allocation2 + $0x70] sm:$0xff] %v513
        %546 = vst [vmem:[#allocation2 + $0x78] sm:$0xff] %v514
        %547 = vst [vmem:[#allocation2 + $0x80] sm:$0xff] %v515
        %548 = vst [vmem:[#allocation2 + $0x88] sm:$0xff] %v516
        %549 = vst [vmem:[#allocation2 + $0x90] sm:$0xff] %v517
        %550 = vst [vmem:[#allocation2 + $0x98] sm:$0xff] %v518
        %551 = vst [vmem:[#allocation2 + $0xa0] sm:$0xff] %v519
        %552 = vst [vmem:[#allocation2 + $0xa8] sm:$0xff] %v520
        %553 = vst [vmem:[#allocation2 + $0xb0] sm:$0xff] %v521
        %554 = vst [vmem:[#allocation2 + $0xb8] sm:$0xff] %v522
        %555 = vst [vmem:[#allocation2 + $0xc0] sm:$0xff] %v523
        %556 = vst [vmem:[#allocation2 + $0xc8] sm:$0xff] %v524
        %557 = vst [vmem:[#allocation2 + $0xd0] sm:$0xff] %v525
        %558 = vst [vmem:[#allocation2 + $0xd8] sm:$0xff] %v526
        %559 = vst [vmem:[#allocation2 + $0xe0] sm:$0xff] %v527
        %560 = vst [vmem:[#allocation2 + $0xe8] sm:$0xff] %v528
        %561 = vst [vmem:[#allocation2 + $0xf0] sm:$0xff] %v529
        %562 = vst [vmem:[#allocation2 + $0xf8] sm:$0xff] %v530
        %p563 = scmp.eq.s32.totalorder %s27, 1
        // Predicated region
        $region41: #{tpu_custom_call.1} parent=27 // pred_check
          %p564 = pneg %p563
        $region42: #{tpu_custom_call.1} parent=27 // pred_check_branch
          %566 = sbr.rel (%p564) target = $region44
        $region43: #{tpu_custom_call.1} parent=27 // pred_region
          %v567 = vld [vmem:[#allocation2] sm:$0xff]
          %v568 = vld [vmem:[#allocation2 + $0x8] sm:$0xff]
          %v569 = vld [vmem:[#allocation2 + $0x10] sm:$0xff]
          %v570 = vld [vmem:[#allocation2 + $0x18] sm:$0xff]
          %v571 = vld [vmem:[#allocation2 + $0x20] sm:$0xff]
          %v572 = vld [vmem:[#allocation2 + $0x28] sm:$0xff]
          %v573 = vld [vmem:[#allocation2 + $0x30] sm:$0xff]
          %v574 = vld [vmem:[#allocation2 + $0x38] sm:$0xff]
          %v575 = vld [vmem:[#allocation2 + $0x40] sm:$0xff]
          %v576 = vld [vmem:[#allocation2 + $0x48] sm:$0xff]
          %v577 = vld [vmem:[#allocation2 + $0x50] sm:$0xff]
          %v578 = vld [vmem:[#allocation2 + $0x58] sm:$0xff]
          %v579 = vld [vmem:[#allocation2 + $0x60] sm:$0xff]
          %v580 = vld [vmem:[#allocation2 + $0x68] sm:$0xff]
          %v581 = vld [vmem:[#allocation2 + $0x70] sm:$0xff]
          %v582 = vld [vmem:[#allocation2 + $0x78] sm:$0xff]
          %v583 = vld [vmem:[#allocation2 + $0x80] sm:$0xff]
          %v584 = vld [vmem:[#allocation2 + $0x88] sm:$0xff]
          %v585 = vld [vmem:[#allocation2 + $0x90] sm:$0xff]
          %v586 = vld [vmem:[#allocation2 + $0x98] sm:$0xff]
          %v587 = vld [vmem:[#allocation2 + $0xa0] sm:$0xff]
          %v588 = vld [vmem:[#allocation2 + $0xa8] sm:$0xff]
          %v589 = vld [vmem:[#allocation2 + $0xb0] sm:$0xff]
          %v590 = vld [vmem:[#allocation2 + $0xb8] sm:$0xff]
          %v591 = vld [vmem:[#allocation2 + $0xc0] sm:$0xff]
          %v592 = vld [vmem:[#allocation2 + $0xc8] sm:$0xff]
          %v593 = vld [vmem:[#allocation2 + $0xd0] sm:$0xff]
          %v594 = vld [vmem:[#allocation2 + $0xd8] sm:$0xff]
          %v595 = vld [vmem:[#allocation2 + $0xe0] sm:$0xff]
          %v596 = vld [vmem:[#allocation2 + $0xe8] sm:$0xff]
          %v597 = vld [vmem:[#allocation2 + $0xf0] sm:$0xff]
          %v598 = vld [vmem:[#allocation2 + $0xf8] sm:$0xff]
          %599 = vst [vmem:[%s218] sm:$0xff] %v567
          %600 = vst [vmem:[%s218 + $0x8] sm:$0xff] %v568
          %601 = vst [vmem:[%s218 + $0x40] sm:$0xff] %v569
          %602 = vst [vmem:[%s218 + $0x48] sm:$0xff] %v570
          %603 = vst [vmem:[%s218 + $0x80] sm:$0xff] %v571
          %604 = vst [vmem:[%s218 + $0x88] sm:$0xff] %v572
          %605 = vst [vmem:[%s218 + $0xc0] sm:$0xff] %v573
          %606 = vst [vmem:[%s218 + $0xc8] sm:$0xff] %v574
          %607 = vst [vmem:[%s218 + $0x100] sm:$0xff] %v575
          %608 = vst [vmem:[%s218 + $0x108] sm:$0xff] %v576
          %609 = vst [vmem:[%s218 + $0x140] sm:$0xff] %v577
          %610 = vst [vmem:[%s218 + $0x148] sm:$0xff] %v578
          %611 = vst [vmem:[%s218 + $0x180] sm:$0xff] %v579
          %612 = vst [vmem:[%s218 + $0x188] sm:$0xff] %v580
          %613 = vst [vmem:[%s218 + $0x1c0] sm:$0xff] %v581
          %614 = vst [vmem:[%s218 + $0x1c8] sm:$0xff] %v582
          %615 = vst [vmem:[%s218 + $0x200] sm:$0xff] %v583
          %616 = vst [vmem:[%s218 + $0x208] sm:$0xff] %v584
          %617 = vst [vmem:[%s218 + $0x240] sm:$0xff] %v585
          %618 = vst [vmem:[%s218 + $0x248] sm:$0xff] %v586
          %619 = vst [vmem:[%s218 + $0x280] sm:$0xff] %v587
          %620 = vst [vmem:[%s218 + $0x288] sm:$0xff] %v588
          %621 = vst [vmem:[%s218 + $0x2c0] sm:$0xff] %v589
          %622 = vst [vmem:[%s218 + $0x2c8] sm:$0xff] %v590
          %623 = vst [vmem:[%s218 + $0x300] sm:$0xff] %v591
          %624 = vst [vmem:[%s218 + $0x308] sm:$0xff] %v592
          %625 = vst [vmem:[%s218 + $0x340] sm:$0xff] %v593
          %626 = vst [vmem:[%s218 + $0x348] sm:$0xff] %v594
          %627 = vst [vmem:[%s218 + $0x380] sm:$0xff] %v595
          %628 = vst [vmem:[%s218 + $0x388] sm:$0xff] %v596
          %629 = vst [vmem:[%s218 + $0x3c0] sm:$0xff] %v597
          %630 = vst [vmem:[%s218 + $0x3c8] sm:$0xff] %v598
          %631 = vst [vmem:[%s218 + $0x10] sm:$0xff] %v567
          %632 = vst [vmem:[%s218 + $0x18] sm:$0xff] %v568
          %633 = vst [vmem:[%s218 + $0x50] sm:$0xff] %v569
          %634 = vst [vmem:[%s218 + $0x58] sm:$0xff] %v570
          %635 = vst [vmem:[%s218 + $0x90] sm:$0xff] %v571
          %636 = vst [vmem:[%s218 + $0x98] sm:$0xff] %v572
          %637 = vst [vmem:[%s218 + $0xd0] sm:$0xff] %v573
          %638 = vst [vmem:[%s218 + $0xd8] sm:$0xff] %v574
          %639 = vst [vmem:[%s218 + $0x110] sm:$0xff] %v575
          %640 = vst [vmem:[%s218 + $0x118] sm:$0xff] %v576
          %641 = vst [vmem:[%s218 + $0x150] sm:$0xff] %v577
          %642 = vst [vmem:[%s218 + $0x158] sm:$0xff] %v578
          %643 = vst [vmem:[%s218 + $0x190] sm:$0xff] %v579
          %644 = vst [vmem:[%s218 + $0x198] sm:$0xff] %v580
          %645 = vst [vmem:[%s218 + $0x1d0] sm:$0xff] %v581
          %646 = vst [vmem:[%s218 + $0x1d8] sm:$0xff] %v582
          %647 = vst [vmem:[%s218 + $0x210] sm:$0xff] %v583
          %648 = vst [vmem:[%s218 + $0x218] sm:$0xff] %v584
          %649 = vst [vmem:[%s218 + $0x250] sm:$0xff] %v585
          %650 = vst [vmem:[%s218 + $0x258] sm:$0xff] %v586
          %651 = vst [vmem:[%s218 + $0x290] sm:$0xff] %v587
          %652 = vst [vmem:[%s218 + $0x298] sm:$0xff] %v588
          %653 = vst [vmem:[%s218 + $0x2d0] sm:$0xff] %v589
          %654 = vst [vmem:[%s218 + $0x2d8] sm:$0xff] %v590
          %655 = vst [vmem:[%s218 + $0x310] sm:$0xff] %v591
          %656 = vst [vmem:[%s218 + $0x318] sm:$0xff] %v592
          %657 = vst [vmem:[%s218 + $0x350] sm:$0xff] %v593
          %658 = vst [vmem:[%s218 + $0x358] sm:$0xff] %v594
          %659 = vst [vmem:[%s218 + $0x390] sm:$0xff] %v595
          %660 = vst [vmem:[%s218 + $0x398] sm:$0xff] %v596
          %661 = vst [vmem:[%s218 + $0x3d0] sm:$0xff] %v597
          %662 = vst [vmem:[%s218 + $0x3d8] sm:$0xff] %v598
          %663 = vst [vmem:[%s218 + $0x20] sm:$0xff] %v567
          %664 = vst [vmem:[%s218 + $0x28] sm:$0xff] %v568
          %665 = vst [vmem:[%s218 + $0x60] sm:$0xff] %v569
          %666 = vst [vmem:[%s218 + $0x68] sm:$0xff] %v570
          %667 = vst [vmem:[%s218 + $0xa0] sm:$0xff] %v571
          %668 = vst [vmem:[%s218 + $0xa8] sm:$0xff] %v572
          %669 = vst [vmem:[%s218 + $0xe0] sm:$0xff] %v573
          %670 = vst [vmem:[%s218 + $0xe8] sm:$0xff] %v574
          %671 = vst [vmem:[%s218 + $0x120] sm:$0xff] %v575
          %672 = vst [vmem:[%s218 + $0x128] sm:$0xff] %v576
          %673 = vst [vmem:[%s218 + $0x160] sm:$0xff] %v577
          %674 = vst [vmem:[%s218 + $0x168] sm:$0xff] %v578
          %675 = vst [vmem:[%s218 + $0x1a0] sm:$0xff] %v579
          %676 = vst [vmem:[%s218 + $0x1a8] sm:$0xff] %v580
          %677 = vst [vmem:[%s218 + $0x1e0] sm:$0xff] %v581
          %678 = vst [vmem:[%s218 + $0x1e8] sm:$0xff] %v582
          %679 = vst [vmem:[%s218 + $0x220] sm:$0xff] %v583
          %680 = vst [vmem:[%s218 + $0x228] sm:$0xff] %v584
          %681 = vst [vmem:[%s218 + $0x260] sm:$0xff] %v585
          %682 = vst [vmem:[%s218 + $0x268] sm:$0xff] %v586
          %683 = vst [vmem:[%s218 + $0x2a0] sm:$0xff] %v587
          %684 = vst [vmem:[%s218 + $0x2a8] sm:$0xff] %v588
          %685 = vst [vmem:[%s218 + $0x2e0] sm:$0xff] %v589
          %686 = vst [vmem:[%s218 + $0x2e8] sm:$0xff] %v590
          %687 = vst [vmem:[%s218 + $0x320] sm:$0xff] %v591
          %688 = vst [vmem:[%s218 + $0x328] sm:$0xff] %v592
          %689 = vst [vmem:[%s218 + $0x360] sm:$0xff] %v593
          %690 = vst [vmem:[%s218 + $0x368] sm:$0xff] %v594
          %691 = vst [vmem:[%s218 + $0x3a0] sm:$0xff] %v595
          %692 = vst [vmem:[%s218 + $0x3a8] sm:$0xff] %v596
          %693 = vst [vmem:[%s218 + $0x3e0] sm:$0xff] %v597
          %694 = vst [vmem:[%s218 + $0x3e8] sm:$0xff] %v598
          %695 = vst [vmem:[%s218 + $0x30] sm:$0xff] %v567
          %696 = vst [vmem:[%s218 + $0x38] sm:$0xff] %v568
          %697 = vst [vmem:[%s218 + $0x70] sm:$0xff] %v569
          %698 = vst [vmem:[%s218 + $0x78] sm:$0xff] %v570
          %699 = vst [vmem:[%s218 + $0xb0] sm:$0xff] %v571
          %700 = vst [vmem:[%s218 + $0xb8] sm:$0xff] %v572
          %701 = vst [vmem:[%s218 + $0xf0] sm:$0xff] %v573
          %702 = vst [vmem:[%s218 + $0xf8] sm:$0xff] %v574
          %703 = vst [vmem:[%s218 + $0x130] sm:$0xff] %v575
          %704 = vst [vmem:[%s218 + $0x138] sm:$0xff] %v576
          %705 = vst [vmem:[%s218 + $0x170] sm:$0xff] %v577
          %706 = vst [vmem:[%s218 + $0x178] sm:$0xff] %v578
          %707 = vst [vmem:[%s218 + $0x1b0] sm:$0xff] %v579
          %708 = vst [vmem:[%s218 + $0x1b8] sm:$0xff] %v580
          %709 = vst [vmem:[%s218 + $0x1f0] sm:$0xff] %v581
          %710 = vst [vmem:[%s218 + $0x1f8] sm:$0xff] %v582
          %711 = vst [vmem:[%s218 + $0x230] sm:$0xff] %v583
          %712 = vst [vmem:[%s218 + $0x238] sm:$0xff] %v584
          %713 = vst [vmem:[%s218 + $0x270] sm:$0xff] %v585
          %714 = vst [vmem:[%s218 + $0x278] sm:$0xff] %v586
          %715 = vst [vmem:[%s218 + $0x2b0] sm:$0xff] %v587
          %716 = vst [vmem:[%s218 + $0x2b8] sm:$0xff] %v588
          %717 = vst [vmem:[%s218 + $0x2f0] sm:$0xff] %v589
          %718 = vst [vmem:[%s218 + $0x2f8] sm:$0xff] %v590
          %719 = vst [vmem:[%s218 + $0x330] sm:$0xff] %v591
          %720 = vst [vmem:[%s218 + $0x338] sm:$0xff] %v592
          %721 = vst [vmem:[%s218 + $0x370] sm:$0xff] %v593
          %722 = vst [vmem:[%s218 + $0x378] sm:$0xff] %v594
          %723 = vst [vmem:[%s218 + $0x3b0] sm:$0xff] %v595
          %724 = vst [vmem:[%s218 + $0x3b8] sm:$0xff] %v596
          %725 = vst [vmem:[%s218 + $0x3f0] sm:$0xff] %v597
          %726 = vst [vmem:[%s218 + $0x3f8] sm:$0xff] %v598
        $region44: #{tpu_custom_call.1} parent=27 // pred_fallthru
          _
        %s727 = sand.u32 %s96, 1
        %s728 = scalar_lea.sflag [#allocation5], %s727
        %s729 = sand.u32 %s96, 1
        %s730 = smul.addr %s729, 1024
        %s731 = scalar_lea.vmem [#allocation8], %s730
        // Predicated region
        $region45: #{tpu_custom_call.1} parent=27 // pred_check
          %p732 = pneg %p106
        $region46: #{tpu_custom_call.1} parent=27 // pred_check_branch
          %734 = sbr.rel (%p732) target = $region48
        $region47: #{tpu_custom_call.1} parent=27 // pred_region
          %s735 = smul.u32 16, %s26
          %s737 = ssub.s32 16384, 16384
          %738 = vsyncadd %s728, %s737
          %s739 = smul.addr %s735, 8
          %s740 = smul.addr %s739, 128
          %s741 = scalar_lea.hbm %s2, %s740
          %s742 = sshll.u32 %s731, 4
          %s743 = int_to_ptr.vmem [resolvable:$true] %s742
          %748 = dma.vmem_to_hbm [thread:$0]  %s743, 16384, %s741, %s728, 1024, 1024, 64
        $region48: #{tpu_custom_call.1} parent=27 // pred_fallthru
          _
      $region28: #{tpu_custom_call.1} parent=5 // pred_fallthru
        _
      %p749 = scmp.le.s32.totalorder 2, %s17
      // Predicated region
      $region49: #{tpu_custom_call.1} parent=5 // pred_check
        %p750 = pneg %p749
      $region50: #{tpu_custom_call.1} parent=5 // pred_check_branch
        %752 = sbr.rel (%p750) target = $region52
      $region51: #{tpu_custom_call.1} parent=5 // pred_region
        %s753 = ssub.s32 %s17, 2
        // Predicated region
        $region53: #{tpu_custom_call.1} parent=51 // pred_check
          %p754 = pneg %p112
        $region54: #{tpu_custom_call.1} parent=51 // pred_check_branch
          %756 = sbr.rel (%p754) target = $region56
        $region55: #{tpu_custom_call.1} parent=51 // pred_region
          %s757 = sand.u32 %s97, 1
          %s758 = scalar_lea.sflag [#allocation5], %s757
          %s759 = sand.u32 %s97, 1
          %s760 = smul.addr %s759, 1024
          %s761 = scalar_lea.vmem [#allocation8], %s760
          %762 = dma.done %s758, 16384
        $region56: #{tpu_custom_call.1} parent=51 // pred_fallthru
          _
      $region52: #{tpu_custom_call.1} parent=5 // pred_fallthru
        _
    $region6: #{tpu_custom_call.1} parent=1 // loop_footer
      %s21 = sadd.s32 1, %s17
    $region7: #{tpu_custom_call.1} parent=1 // loop_footer_branch
      %16 = sbr.rel target = $region3
    $region8: #{tpu_custom_call.1} parent=1 // loop_exit
      _
    %763 = vsyncpa [#allocation4], 1
    %s764 = scalar_lea.sflag [#allocation4], 1
    %765 = vsyncpa %s764, 1
    %766 = vsyncpa [#allocation7], 1
    %s767 = scalar_lea.sflag [#allocation7], 1
    %768 = vsyncpa %s767, 1
    %769 = vsyncpa [#allocation5], 1
    %s770 = scalar_lea.sflag [#allocation5], 1
    %771 = vsyncpa %s770, 1

</llo_original>
